<compile_context>
chip_gen: v5e
topology: v5e:2x2
jax: 0.10.0
libtpu: 0.0.40
codegen_flags: <defaults>
</compile_context>

<pallas_src>
import jax
import jax.numpy as jnp
from jax.experimental import pallas as pl
from jax.experimental.pallas import tpu as pltpu


def _round_up(x: int, m: int) -> int:
    return ((x + m - 1) // m) * m


def _largest_divisor_tile(dim: int, align: int, cap: int):
    """Largest multiple of `align` that divides `dim` and is <= cap (>= align)."""
    t = min(cap, dim)
    t = (t // align) * align
    while t >= align:
        if dim % t == 0:
            return t
        t -= align
    return None


def _pick_m_tile(batch: int, sub: int, cap: int):
    """Return (tm, m_pad). Prefers no activation padding and >=2 M tiles."""
    if batch <= sub:
        return batch, batch                         # single tiny full block
    if batch % sub == 0:
        target = min(cap, batch)
        if target == batch and batch >= 2 * sub:
            # aim for >= 2 tiles so both v7x TCs / megacore get work
            target = max(sub, (batch // 2 // sub) * sub)
        tm = _largest_divisor_tile(batch, sub, max(target, sub))
        return tm, batch                            # divisor of batch -> no pad
    if batch <= cap:
        return batch, batch                         # odd batch, single full block
    return cap, _round_up(batch, cap)               # rare: large + unaligned -> pad


# ---------------------------------------------------------------------------
# Kernels
# ---------------------------------------------------------------------------

def _project_kernel_fused(x_ref, w_ref, o_ref):
    """Single-shot: full-K contraction on the MXU, tanh epilogue (EUP), store.

    No accumulator scratch, no init/finalize -- used whenever K fits in one
    block (always true on the weight-resident path).
    """
    o_ref[...] = jnp.tanh(
        jnp.dot(x_ref[...], w_ref[...], preferred_element_type=jnp.float32)
    ).astype(o_ref.dtype)


def _project_kernel_acc(x_ref, w_ref, o_ref, acc_ref):
    """General (M, N, K)-tiled path with a float32 VMEM accumulator."""
    @pl.when(pl.program_id(2) == 0)
    def _():
        acc_ref[...] = jnp.zeros_like(acc_ref)

    acc_ref[...] += jnp.dot(
        x_ref[...], w_ref[...], preferred_element_type=jnp.float32
    )

    @pl.when(pl.program_id(2) == pl.num_programs(2) - 1)
    def _():
        o_ref[...] = jnp.tanh(acc_ref[...]).astype(o_ref.dtype)


# ---------------------------------------------------------------------------
# Wrapper
# ---------------------------------------------------------------------------

def project(x, weight, *, compute_dtype=None):
    """tanh(x @ weight.T); weight has PyTorch nn.Linear layout (nout, ninp).

    compute_dtype: optional dtype (e.g. jnp.bfloat16) for the MXU operands;
    accumulation is always float32 and the output keeps x's dtype.
    """
    orig_shape = x.shape
    ninp = orig_shape[-1]
    nout, ninp_w = weight.shape
    assert ninp == ninp_w, (ninp, ninp_w)
    out_dtype = x.dtype
    out_size = jnp.dtype(out_dtype).itemsize

    x2d = x.reshape(-1, ninp)
    batch = x2d.shape[0]

    cdtype = jnp.dtype(compute_dtype) if compute_dtype is not None else x2d.dtype
    csize = cdtype.itemsize
    sub = 16 if csize == 2 else 8

    # One-time host-side transpose + (optional) cast of the weight: the kernel
    # then contracts (tm, K) x (K, N) with no in-kernel transpose.
    wt = weight.T.astype(cdtype)                       # (ninp, nout)
    if cdtype != x2d.dtype:
        x2d = x2d.astype(cdtype)

    # Lane-dense output: pad nout up to a multiple of 128 (weight-only pad).
    n_pad = _round_up(nout, 128)
    if n_pad != nout:
        wt = jnp.pad(wt, ((0, 0), (0, n_pad - nout)))

    # --- M tiling (prefers divisors of batch: no activation padding) ---
    TM_CAP = 512
    tm, m_pad = _pick_m_tile(batch, sub, TM_CAP)
    grid_m = m_pad // tm

    VMEM_BUDGET = 40 << 20     # conservative across v5e / v6e / v7x
    VMEM_CAP = 48 << 20        # leave headroom under v7x's 64 MiB per TC

    # ------------------------------------------------------------------
    # Path A: whole weight resident in VMEM, grid = (M,), no K loop.
    # ------------------------------------------------------------------
    w_bytes = ninp * n_pad * csize
    resident_bytes = (2 * w_bytes                    # weight (buffer allocation)
                      + 2 * tm * ninp * csize        # x tiles (double-buffered)
                      + 2 * tm * n_pad * out_size)   # out tiles (double-buffered)

    if resident_bytes <= VMEM_BUDGET:
        if m_pad != batch:
            x2d = jnp.pad(x2d, ((0, m_pad - batch), (0, 0)))

        cost = pl.CostEstimate(
            flops=2 * m_pad * ninp * n_pad,
            transcendentals=m_pad * n_pad,
            bytes_accessed=(m_pad * ninp * csize        # x read once
                            + ninp * n_pad * csize      # W read once (resident)
                            + m_pad * n_pad * out_size),
        )
        vmem_limit = min(max(resident_bytes + (4 << 20), 16 << 20), VMEM_CAP)

        out_p = pl.pallas_call(
            _project_kernel_fused,
            out_shape=jax.ShapeDtypeStruct((m_pad, n_pad), out_dtype),
            grid_spec=pltpu.PrefetchScalarGridSpec(
                num_scalar_prefetch=0,
                grid=(grid_m,),
                in_specs=[
                    pl.BlockSpec((tm, ninp), lambda i: (i, 0)),        # x
                    pl.BlockSpec((ninp, n_pad), lambda i: (0, 0)),     # W.T resident
                ],
                out_specs=pl.BlockSpec((tm, n_pad), lambda i: (i, 0)),
            ),
            compiler_params=pltpu.CompilerParams(
                dimension_semantics=("parallel",),
                vmem_limit_bytes=vmem_limit,
            ),
            cost_estimate=cost,
        )(x2d, wt)

    # ------------------------------------------------------------------
    # Path B: weight too large for residency -> tiled (M, N[, K]) grid.
    # ------------------------------------------------------------------
    else:
        tn = _largest_divisor_tile(n_pad, 128, 512)    # n_pad % 128 == 0 always
        grid_n = n_pad // tn

        TK_CAP = 2048
        if ninp % 128 == 0:
            tk = _largest_divisor_tile(ninp, 128, TK_CAP)
            k_pad = ninp                                # no activation K padding
        elif ninp <= TK_CAP:
            tk = ninp                                   # full-K block, no padding
            k_pad = ninp
        else:
            tk = TK_CAP                                 # rare: pad K
            k_pad = _round_up(ninp, tk)
        grid_k = k_pad // tk

        pad_m = m_pad - batch
        pad_k = k_pad - ninp
        if pad_m or pad_k:
            x2d = jnp.pad(x2d, ((0, pad_m), (0, pad_k)))
        if pad_k:
            wt = jnp.pad(wt, ((0, pad_k), (0, 0)))

        need_bytes = (2 * tm * tk * csize
                      + 2 * tk * tn * csize
                      + 2 * tm * tn * out_size
                      + (tm * tn * 4 if grid_k > 1 else 0))
        vmem_limit = min(max(need_bytes + (4 << 20), 16 << 20), VMEM_CAP)

        cost = pl.CostEstimate(
            flops=2 * m_pad * k_pad * n_pad,
            transcendentals=m_pad * n_pad,
            bytes_accessed=(grid_n * m_pad * k_pad * csize     # x re-read per N tile
                            + grid_m * k_pad * n_pad * csize   # W re-read per M tile
                            + m_pad * n_pad * out_size),
        )

        if grid_k == 1:
            out_p = pl.pallas_call(
                _project_kernel_fused,
                out_shape=jax.ShapeDtypeStruct((m_pad, n_pad), out_dtype),
                grid_spec=pltpu.PrefetchScalarGridSpec(
                    num_scalar_prefetch=0,
                    grid=(grid_m, grid_n),
                    in_specs=[
                        pl.BlockSpec((tm, tk), lambda i, j: (i, 0)),
                        pl.BlockSpec((tk, tn), lambda i, j: (0, j)),
                    ],
                    out_specs=pl.BlockSpec((tm, tn), lambda i, j: (i, j)),
                ),
                compiler_params=pltpu.CompilerParams(
                    dimension_semantics=("parallel", "parallel"),
                    vmem_limit_bytes=vmem_limit,
                ),
                cost_estimate=cost,
            )(x2d, wt)
        else:
            out_p = pl.pallas_call(
                _project_kernel_acc,
                out_shape=jax.ShapeDtypeStruct((m_pad, n_pad), out_dtype),
                grid_spec=pltpu.PrefetchScalarGridSpec(
                    num_scalar_prefetch=0,
                    grid=(grid_m, grid_n, grid_k),
                    in_specs=[
                        pl.BlockSpec((tm, tk), lambda i, j, k: (i, k)),
                        pl.BlockSpec((tk, tn), lambda i, j, k: (k, j)),
                    ],
                    out_specs=pl.BlockSpec((tm, tn), lambda i, j, k: (i, j)),
                    scratch_shapes=[pltpu.VMEM((tm, tn), jnp.float32)],
                ),
                compiler_params=pltpu.CompilerParams(
                    dimension_semantics=("parallel", "parallel", "arbitrary"),
                    vmem_limit_bytes=vmem_limit,
                ),
                cost_estimate=cost,
            )(x2d, wt)

    # Strip padding only if it was actually added (avoids an HBM copy).
    out2d = out_p
    if (out_p.shape[0], out_p.shape[1]) != (batch, nout):
        out2d = out_p[:batch, :nout]
    return out2d.reshape(*orig_shape[:-1], nout)


if __name__ == "__main__":
    key = jax.random.PRNGKey(0)
    kx, kw, kx2, kw2, kx3 = jax.random.split(key, 5)

    # --- small shapes consistent with the module: Project(ninp=32, nout=64) ---
    batch, ninp, nout = 8, 32, 64
    x = jax.random.normal(kx, (batch, ninp), dtype=jnp.float32)
    bound = 1.0 / (ninp ** 0.5)
    w = jax.random.uniform(kw, (nout, ninp), jnp.float32, -bound, bound)

    out = project(x, w)
    jax.block_until_ready(out)
    ref = jnp.tanh(x @ w.T)
    assert out.shape == (batch, nout)
    assert jnp.allclose(out, ref, atol=1e-5, rtol=1e-5)

    # --- odd batch (not a sublane multiple): full-block path, no padding of x ---
    x3 = jax.random.normal(kx3, (13, ninp), dtype=jnp.float32)
    out3 = project(x3, w)
    jax.block_until_ready(out3)
    assert out3.shape == (13, nout)
    assert jnp.allclose(out3, jnp.tanh(x3 @ w.T), atol=1e-5, rtol=1e-5)

    # --- larger case: weight-resident path, grid_m = 2 (both TCs on v7x) ---
    b2, k2, n2 = 256, 1024, 384
    x2 = jax.random.normal(kx2, (b2, k2), dtype=jnp.float32)
    bound2 = 1.0 / (k2 ** 0.5)
    w2 = jax.random.uniform(kw2, (n2, k2), jnp.float32, -bound2, bound2)
    out2 = project(x2, w2)
    jax.block_until_ready(out2)
    ref2 = jnp.tanh(x2 @ w2.T)
    assert out2.shape == (b2, n2)
    assert jnp.allclose(out2, ref2, atol=1e-4, rtol=1e-4)

    # --- bf16 MXU operands with f32 accumulation + f32 tanh epilogue ---
    out2_bf16 = project(x2, w2, compute_dtype=jnp.bfloat16)
    jax.block_until_ready(out2_bf16)
    assert out2_bf16.dtype == jnp.float32
    assert jnp.allclose(out2_bf16, ref2, atol=3e-2, rtol=3e-2)

    print("KERNEL_OK")
</pallas_src>

<mosaic_0001>
module attributes {stable_mosaic.version = 11 : i64} {
  func.func @_project_kernel_fused(%arg0: i32, %arg1: memref<8x32xf32, #tpu.memory_space<vmem>>, %arg2: memref<32x128xf32, #tpu.memory_space<vmem>>, %arg3: memref<8x128xf32, #tpu.memory_space<vmem>>) attributes {dimension_semantics = [#tpu.dimension_semantics<parallel>], iteration_bounds = array<i64: 1>, scalar_prefetch = 0 : i64, scratch_operands = 0 : i64, tpu.core_type = #tpu.core_type<tc>, window_params = [{transform_indices = @transform_0, window_bounds = array<i64: 8, 32>}, {pipeline_mode = #tpu.pipeline_mode<synchronous>, transform_indices = @transform_1, window_bounds = array<i64: 32, 128>}, {transform_indices = @transform_2, window_bounds = array<i64: 8, 128>}]} {
    %c0 = arith.constant 0 : index
    %c0_0 = arith.constant 0 : index
    %0 = vector.load %arg1[%c0, %c0_0] : memref<8x32xf32, #tpu.memory_space<vmem>>, vector<8x32xf32>
    %c0_1 = arith.constant 0 : index
    %c0_2 = arith.constant 0 : index
    %1 = vector.load %arg2[%c0_1, %c0_2] : memref<32x128xf32, #tpu.memory_space<vmem>>, vector<32x128xf32>
    %cst = arith.constant dense<0.000000e+00> : vector<8x128xf32>
    %2 = tpu.matmul %0, %1, %cst {dimension_numbers = #tpu.dot_dimension_numbers<[1], [0], [0], [1], [0, 0, 1, 1], [], []>} : vector<8x32xf32>, vector<32x128xf32>, vector<8x128xf32> -> vector<8x128xf32>
    %3 = math.tanh %2 : vector<8x128xf32>
    %c0_3 = arith.constant 0 : index
    %c0_4 = arith.constant 0 : index
    %4 = vector.load %arg3[%c0_3, %c0_4] : memref<8x128xf32, #tpu.memory_space<vmem>>, vector<8x128xf32>
    tpu.vector_store %arg3[%c0_3, %c0_4], %3 {strides = array<i32>} : memref<8x128xf32, #tpu.memory_space<vmem>>, vector<8x128xf32>,
    return
  }
  func.func @transform_0(%arg0: i32) -> (i32, i32) {
    %c0_i32 = arith.constant 0 : i32
    %c0_i32_0 = arith.constant 0 : i32
    return %arg0, %c0_i32 : i32, i32
  }
  func.func @transform_1(%arg0: i32) -> (i32, i32) {
    %c0_i32 = arith.constant 0 : i32
    %c0_i32_0 = arith.constant 0 : i32
    %c0_i32_1 = arith.constant 0 : i32
    return %c0_i32, %c0_i32_0 : i32, i32
  }
  func.func @transform_2(%arg0: i32) -> (i32, i32) {
    %c0_i32 = arith.constant 0 : i32
    %c0_i32_0 = arith.constant 0 : i32
    return %arg0, %c0_i32 : i32, i32
  }
}

</mosaic_0001>

<llo_original>
// kernel: tpu_custom_call.1
$region0: #{tpu_custom_call.1}
  #allocation0 [shape = 'u32[]', space=smem, size = 0x4, offset = 0x4, fixed_abs, tag = 'smem constant byte address 0x4 - core index']
  #allocation1 [shape = 'u32[72,128]{1,0:T(1,128)}', space=vmem, size = 0x9000, scoped, tag = 'internal scratch']
  %s0 = inlined_call_operand.hbm [shape: f32[8,32], index: 0, kind: input, shape index: {}]
  %s1 = inlined_call_operand.hbm [shape: f32[32,128], index: 1, kind: input, shape index: {}]
  %s2 = inlined_call_operand.hbm [shape: f32[8,128], index: 2, kind: output, shape index: {}]
  %s3 = sld [smem:[#allocation0]]
  $region26: #{tpu_custom_call.1} parent=0
    _
  %s5 = ssub.s32 1, %s3
  %s6 = scalar_select 0, %s5, %s3
  $region1: #{tpu_custom_call.1} parent=0
    #allocation2 [shape = 'u8[4096]{0}', space=vmem, size = 0x1000, scoped, tag = 'input window, operand 0, single buffered']
    #allocation3 [shape = 's32[1]{0}', space=sflag, size = 0x4, scoped, tag = 'scoped memory for tpu_custom_call.1']
    #allocation4 [shape = 's32[1]{0}', space=sflag, size = 0x4, scoped, tag = 'scoped memory for tpu_custom_call.1']
    #allocation5 [shape = 'u8[16384]{0}', space=vmem, size = 0x4000, scoped, tag = 'input window, operand 1, single buffered']
    #allocation6 [shape = 's32[1]{0}', space=sflag, size = 0x4, scoped, tag = 'scoped memory for tpu_custom_call.1']
    #allocation7 [shape = 'u8[4096]{0}', space=vmem, size = 0x1000, scoped, tag = 'output window, operand 0, single buffered']
    %7 = vsyncpa [#allocation3], 0
    %8 = vsyncpa [#allocation6], 0
    %9 = vsyncpa [#allocation4], 0
    // Predicated region
    $region2: #{tpu_custom_call.1} parent=1 // pred_check
      _
    $region3: #{tpu_custom_call.1} parent=1 // pred_check_branch
      %11 = sbr.rel (0) target = $region5
    $region4: #{tpu_custom_call.1} parent=1 // pred_region
      %13 = vsyncadd [#allocation3], 0
      %s15 = sshll.u32 %s0, 4
      %s16 = int_to_ptr.hbm [resolvable:$true] %s15
      %s17 = sshll.u32 [#allocation2], 4
      %s18 = int_to_ptr.vmem [resolvable:$true] %s17
      %20 = dma.hbm_to_vmem [thread:$0]  %s16, 128, %s18, [#allocation3]
    $region5: #{tpu_custom_call.1} parent=1 // pred_fallthru
      _
    // Predicated region
    $region6: #{tpu_custom_call.1} parent=1 // pred_check
      _
    $region7: #{tpu_custom_call.1} parent=1 // pred_check_branch
      %22 = sbr.rel (0) target = $region9
    $region8: #{tpu_custom_call.1} parent=1 // pred_region
      %24 = vsyncadd [#allocation6], 0
      %s25 = sshll.u32 %s1, 4
      %s26 = int_to_ptr.hbm [resolvable:$true] %s25
      %s27 = sshll.u32 [#allocation5], 4
      %s28 = int_to_ptr.vmem [resolvable:$true] %s27
      %33 = dma.hbm_to_vmem [thread:$0]  %s26, 512, %s28, [#allocation6], 128, 128, 8
    $region9: #{tpu_custom_call.1} parent=1 // pred_fallthru
      _
    // Predicated region
    $region10: #{tpu_custom_call.1} parent=1 // pred_check
      _
    $region11: #{tpu_custom_call.1} parent=1 // pred_check_branch
      %35 = sbr.rel (0) target = $region13
    $region12: #{tpu_custom_call.1} parent=1 // pred_region
      %37 = dma.done [#allocation3], 128
    $region13: #{tpu_custom_call.1} parent=1 // pred_fallthru
      _
    // Predicated region
    $region14: #{tpu_custom_call.1} parent=1 // pred_check
      _
    $region15: #{tpu_custom_call.1} parent=1 // pred_check_branch
      %39 = sbr.rel (0) target = $region17
    $region16: #{tpu_custom_call.1} parent=1 // pred_region
      %41 = dma.done [#allocation6], 512
    $region17: #{tpu_custom_call.1} parent=1 // pred_fallthru
      _
    %v42 = vld [vmem:[#allocation2] sm:$0xff]
    %v43 = vld [vmem:[#allocation5] sm:$0xff]
    %v44 = vld [vmem:[#allocation5 + $0x8] sm:$0xff]
    %v45 = vld [vmem:[#allocation5 + $0x10] sm:$0xff]
    %v46 = vld [vmem:[#allocation5 + $0x18] sm:$0xff]
    %vm47 = vcmask 261120
    %v49 = vsel %vm47, %v42, 0
    %51 = vmatpush.msra.mxu0 0.0
    %52 = vmatpush.msra.mxu0 0.0
    %53 = vmatpush.msra.mxu0 0.0
    %54 = vmatpush.msra.mxu0 0.0
    %55 = vmatpush.msra.mxu0 0.0
    %56 = vmatpush.msra.mxu0 0.0
    %57 = vmatpush.msra.mxu0 0.0
    %58 = vmatpush.msra.mxu0 0.0
    %59 = vmatpush.msra.mxu0 0.0
    %60 = vmatpush.msra.mxu0 0.0
    %61 = vmatpush.msra.mxu0 0.0
    %62 = vmatpush.msra.mxu0 0.0
    %63 = vmatpush.msra.mxu0 %v46
    %64 = vmatpush.msra.mxu0 %v45
    %65 = vmatpush.msra.mxu0 %v44
    %66 = vmatpush.msra.mxu0 %v43
    %67 = vmatmul.f32.gmra.mxu0 %v49
    %v68 = vpop.f32.mrf.mxu0
    %v69 = vadd.f32 0.0, %v68
    %70 = vdwg.mxu0
    %v71 = vtanh.pop %v69
    %72 = vst [vmem:[#allocation7] sm:$0xff] %v71
    // Predicated region
    $region18: #{tpu_custom_call.1} parent=1 // pred_check
      _
    $region19: #{tpu_custom_call.1} parent=1 // pred_check_branch
      %74 = sbr.rel (0) target = $region21
    $region20: #{tpu_custom_call.1} parent=1 // pred_region
      %76 = vsyncadd [#allocation4], 0
      %s78 = sshll.u32 [#allocation7], 4
      %s79 = int_to_ptr.vmem [resolvable:$true] %s78
      %s80 = sshll.u32 %s2, 4
      %s81 = int_to_ptr.hbm [resolvable:$true] %s80
      %83 = dma.vmem_to_hbm [thread:$0]  %s79, 128, %s81, [#allocation4]
    $region21: #{tpu_custom_call.1} parent=1 // pred_fallthru
      _
    // Predicated region
    $region22: #{tpu_custom_call.1} parent=1 // pred_check
      _
    $region23: #{tpu_custom_call.1} parent=1 // pred_check_branch
      %85 = sbr.rel (0) target = $region25
    $region24: #{tpu_custom_call.1} parent=1 // pred_region
      %87 = dma.done [#allocation4], 128
    $region25: #{tpu_custom_call.1} parent=1 // pred_fallthru
      _
    %88 = vsyncpa [#allocation3], 1
    %89 = vsyncpa [#allocation6], 1
    %90 = vsyncpa [#allocation4], 1

</llo_original>
